<compile_context>
chip_gen: v6e
topology: v6e:2x2x1
jax: 0.10.0
libtpu: 0.0.40
codegen_flags: <defaults>
</compile_context>

<pallas_src>
import functools

import jax
import jax.numpy as jnp
from jax.experimental import pallas as pl
from jax.experimental.pallas import tpu as pltpu


def _frn_kernel(x_ref, gamma_ref, beta_ref, tau_ref, o_ref, *, eps, inv_t):
    # x_ref/o_ref: (r_tile, T_pad); gamma/beta/tau: (r_tile, 1)
    x = x_ref[...]
    # Padded lanes are zero, so sum(x^2) * (1/true_T) is the exact mean over true T.
    v = jnp.sum(x * x, axis=-1, keepdims=True) * inv_t          # (r_tile, 1), XLU reduce
    xn = x * jax.lax.rsqrt(v + eps)                              # EUP rsqrt, lane-broadcast
    y = gamma_ref[...] * xn + beta_ref[...]                      # per-row affine
    o_ref[...] = jnp.maximum(y, tau_ref[...])                    # thresholded activation


def _round_up(n, m):
    return ((n + m - 1) // m) * m


def filter_response_norm(x, gamma, beta, tau, eps=1e-6):
    """x: (B, C, T) float32; gamma/beta/tau: (1, C, 1) float32."""
    B, C, T = x.shape
    assert gamma.shape == (1, C, 1) and beta.shape == (1, C, 1) and tau.shape == (1, C, 1)

    rows = B * C

    # ---- wrapper-side layout plumbing (flatten + lane/sublane padding) ----------
    T_pad = _round_up(T, 128)                       # lane-dense loads/stores
    xf = x.reshape(rows, T)

    # Row tile: multiple of 8, ~4 MiB per f32 block, never larger than needed.
    bytes_per_row = T_pad * 4
    r_target = (4 * 1024 * 1024) // bytes_per_row
    r_target = max(8, min(1024, (r_target // 8) * 8))
    r_tile = min(r_target, _round_up(rows, 8))
    rows_pad = _round_up(rows, r_tile)

    if T_pad != T or rows_pad != rows:
        xf = jnp.pad(xf, ((0, rows_pad - rows), (0, T_pad - T)))

    # Per-row params, (rows_pad, 1); padded rows get zeros (their output is sliced off).
    def _per_row(p):
        pr = jnp.broadcast_to(p.reshape(1, C), (B, C)).reshape(rows, 1)
        if rows_pad != rows:
            pr = jnp.pad(pr, ((0, rows_pad - rows), (0, 0)))
        return pr

    g_r, b_r, t_r = _per_row(gamma), _per_row(beta), _per_row(tau)

    # ---- VMEM budget: double-buffered x + out blocks, plus tiny param blocks ----
    block_bytes = r_tile * T_pad * 4
    buf_bytes = 2 * 2 * block_bytes + 3 * 2 * r_tile * 4
    vmem_limit = min(60 * 1024 * 1024,
                     max(16 * 1024 * 1024, int(buf_bytes * 1.5) + (1 << 20)))

    kernel = functools.partial(_frn_kernel, eps=float(eps), inv_t=1.0 / float(T))

    row_spec = pl.BlockSpec((r_tile, T_pad), lambda r: (r, 0))
    param_spec = pl.BlockSpec((r_tile, 1), lambda r: (r, 0))

    cost = pl.CostEstimate(
        flops=5 * rows * T,
        transcendentals=rows,
        bytes_accessed=(2 * rows * T + 3 * rows) * 4,
    )

    out = pl.pallas_call(
        kernel,
        out_shape=jax.ShapeDtypeStruct((rows_pad, T_pad), x.dtype),
        grid_spec=pltpu.PrefetchScalarGridSpec(
            num_scalar_prefetch=0,
            grid=(rows_pad // r_tile,),
            in_specs=[row_spec, param_spec, param_spec, param_spec],
            out_specs=row_spec,
        ),
        compiler_params=pltpu.CompilerParams(
            dimension_semantics=("parallel",),
            vmem_limit_bytes=vmem_limit,
        ),
        cost_estimate=cost,
    )(xf, g_r, b_r, t_r)

    return out[:rows, :T].reshape(B, C, T)


def _frn_reference(x, gamma, beta, tau, eps=1e-6):
    v = jnp.mean(jnp.square(x), axis=2, keepdims=True)
    xn = x * jax.lax.rsqrt(v + eps)
    return jnp.maximum(gamma * xn + beta, tau)


if __name__ == "__main__":
    key = jax.random.PRNGKey(0)
    kx, kg, kb, kt = jax.random.split(key, 4)

    B, C, T = 2, 4, 16
    x = jax.random.normal(kx, (B, C, T), dtype=jnp.float32)

    # Parameter shapes from FilterResponseNorm.__init__: (1, num_features, 1).
    # __init__ values are gamma=1, beta=0, tau=0; add a small deterministic
    # perturbation so the affine/threshold broadcast is actually exercised.
    gamma = jnp.ones((1, C, 1), jnp.float32) + 0.1 * jax.random.normal(kg, (1, C, 1), jnp.float32)
    beta = 0.1 * jax.random.normal(kb, (1, C, 1), jnp.float32)
    tau = 0.1 * jax.random.normal(kt, (1, C, 1), jnp.float32)

    out = filter_response_norm(x, gamma, beta, tau, eps=1e-6)
    out = jax.block_until_ready(out)

    ref = _frn_reference(x, gamma, beta, tau, eps=1e-6)
    assert out.shape == (B, C, T)
    assert jnp.allclose(out, ref, atol=1e-5, rtol=1e-5), float(jnp.max(jnp.abs(out - ref)))

    print("KERNEL_OK")
</pallas_src>

<mosaic_0001>
module attributes {stable_mosaic.version = 11 : i64} {
  func.func @_frn_kernel(%arg0: i32, %arg1: memref<8x128xf32, #tpu.memory_space<vmem>>, %arg2: memref<8x1xf32, #tpu.memory_space<vmem>>, %arg3: memref<8x1xf32, #tpu.memory_space<vmem>>, %arg4: memref<8x1xf32, #tpu.memory_space<vmem>>, %arg5: memref<8x128xf32, #tpu.memory_space<vmem>>) attributes {dimension_semantics = [#tpu.dimension_semantics<parallel>], iteration_bounds = array<i64: 1>, scalar_prefetch = 0 : i64, scratch_operands = 0 : i64, tpu.core_type = #tpu.core_type<tc>, window_params = [{transform_indices = @transform_0, window_bounds = array<i64: 8, 128>}, {transform_indices = @transform_1, window_bounds = array<i64: 8, 1>}, {transform_indices = @transform_2, window_bounds = array<i64: 8, 1>}, {transform_indices = @transform_3, window_bounds = array<i64: 8, 1>}, {transform_indices = @transform_4, window_bounds = array<i64: 8, 128>}]} {
    %c0 = arith.constant 0 : index
    %c0_0 = arith.constant 0 : index
    %0 = vector.load %arg1[%c0, %c0_0] : memref<8x128xf32, #tpu.memory_space<vmem>>, vector<8x128xf32>
    %1 = arith.mulf %0, %0 : vector<8x128xf32>
    %cst = arith.constant dense<0.000000e+00> : vector<8xf32>
    %2 = vector.multi_reduction <add>, %1, %cst [1] : vector<8x128xf32> to vector<8xf32>
    %3 = vector.shape_cast %2 : vector<8xf32> to vector<8x1xf32>
    %cst_1 = arith.constant 6.250000e-02 : f32
    %4 = vector.broadcast %cst_1 : f32 to vector<8x1xf32>
    %5 = arith.mulf %3, %4 : vector<8x1xf32>
    %cst_2 = arith.constant 9.99999997E-7 : f32
    %6 = vector.broadcast %cst_2 : f32 to vector<8x1xf32>
    %7 = arith.addf %5, %6 : vector<8x1xf32>
    %8 = math.rsqrt %7 : vector<8x1xf32>
    %9 = vector.broadcast %8 : vector<8x1xf32> to vector<8x128xf32>
    %10 = arith.mulf %0, %9 : vector<8x128xf32>
    %c0_3 = arith.constant 0 : index
    %c0_4 = arith.constant 0 : index
    %11 = vector.load %arg2[%c0_3, %c0_4] : memref<8x1xf32, #tpu.memory_space<vmem>>, vector<8x1xf32>
    %12 = vector.broadcast %11 : vector<8x1xf32> to vector<8x128xf32>
    %13 = arith.mulf %12, %10 : vector<8x128xf32>
    %c0_5 = arith.constant 0 : index
    %c0_6 = arith.constant 0 : index
    %14 = vector.load %arg3[%c0_5, %c0_6] : memref<8x1xf32, #tpu.memory_space<vmem>>, vector<8x1xf32>
    %15 = vector.broadcast %14 : vector<8x1xf32> to vector<8x128xf32>
    %16 = arith.addf %13, %15 : vector<8x128xf32>
    %c0_7 = arith.constant 0 : index
    %c0_8 = arith.constant 0 : index
    %17 = vector.load %arg4[%c0_7, %c0_8] : memref<8x1xf32, #tpu.memory_space<vmem>>, vector<8x1xf32>
    %18 = vector.broadcast %17 : vector<8x1xf32> to vector<8x128xf32>
    %19 = arith.maximumf %16, %18 : vector<8x128xf32>
    %c0_9 = arith.constant 0 : index
    %c0_10 = arith.constant 0 : index
    %20 = vector.load %arg5[%c0_9, %c0_10] : memref<8x128xf32, #tpu.memory_space<vmem>>, vector<8x128xf32>
    tpu.vector_store %arg5[%c0_9, %c0_10], %19 {strides = array<i32>} : memref<8x128xf32, #tpu.memory_space<vmem>>, vector<8x128xf32>,
    return
  }
  func.func @transform_0(%arg0: i32) -> (i32, i32) {
    %c0_i32 = arith.constant 0 : i32
    %c0_i32_0 = arith.constant 0 : i32
    return %arg0, %c0_i32 : i32, i32
  }
  func.func @transform_1(%arg0: i32) -> (i32, i32) {
    %c0_i32 = arith.constant 0 : i32
    %c0_i32_0 = arith.constant 0 : i32
    return %arg0, %c0_i32 : i32, i32
  }
  func.func @transform_2(%arg0: i32) -> (i32, i32) {
    %c0_i32 = arith.constant 0 : i32
    %c0_i32_0 = arith.constant 0 : i32
    return %arg0, %c0_i32 : i32, i32
  }
  func.func @transform_3(%arg0: i32) -> (i32, i32) {
    %c0_i32 = arith.constant 0 : i32
    %c0_i32_0 = arith.constant 0 : i32
    return %arg0, %c0_i32 : i32, i32
  }
  func.func @transform_4(%arg0: i32) -> (i32, i32) {
    %c0_i32 = arith.constant 0 : i32
    %c0_i32_0 = arith.constant 0 : i32
    return %arg0, %c0_i32 : i32, i32
  }
}

</mosaic_0001>

<llo_original>
// kernel: tpu_custom_call.1
$region0: #{tpu_custom_call.1}
  #allocation0 [shape = 'u32[]', space=smem, size = 0x4, offset = 0x4, fixed_abs, tag = 'smem constant byte address 0x4 - core index']
  #allocation1 [shape = 'u32[144,128]{1,0:T(1,128)}', space=vmem, size = 0x12000, scoped, tag = 'internal scratch']
  %s0 = inlined_call_operand.vmem [shape: f32[8,128], index: 0, kind: input, shape index: {}]
  %s1 = inlined_call_operand.vmem [shape: f32[8,1], index: 1, kind: input, shape index: {}]
  %s2 = inlined_call_operand.vmem [shape: f32[8,1], index: 2, kind: input, shape index: {}]
  %s3 = inlined_call_operand.vmem [shape: f32[8,1], index: 3, kind: input, shape index: {}]
  %s4 = inlined_call_operand.hbm [shape: f32[8,128], index: 4, kind: output, shape index: {}]
  %s5 = sld [smem:[#allocation0]]
  $region26: #{tpu_custom_call.1} parent=0
    _
  %s7 = ssub.s32 1, %s5
  %s8 = scalar_select 0, %s7, %s5
  $region1: #{tpu_custom_call.1} parent=0
    #allocation2 [shape = 'u8[4096]{0}', space=vmem, size = 0x1000, scoped, tag = 'output window, operand 0, single buffered']
    #allocation3 [shape = 's32[1]{0}', space=sflag, size = 0x4, scoped, tag = 'scoped memory for tpu_custom_call.1']
    %9 = vsyncpa [#allocation3], 0
    // Predicated region
    $region2: #{tpu_custom_call.1} parent=1 // pred_check
      _
    $region3: #{tpu_custom_call.1} parent=1 // pred_check_branch
      %11 = sbr.rel (0) target = $region5
    $region4: #{tpu_custom_call.1} parent=1 // pred_region
      _
    $region5: #{tpu_custom_call.1} parent=1 // pred_fallthru
      _
    // Predicated region
    $region6: #{tpu_custom_call.1} parent=1 // pred_check
      _
    $region7: #{tpu_custom_call.1} parent=1 // pred_check_branch
      %13 = sbr.rel (0) target = $region9
    $region8: #{tpu_custom_call.1} parent=1 // pred_region
      _
    $region9: #{tpu_custom_call.1} parent=1 // pred_fallthru
      _
    // Predicated region
    $region10: #{tpu_custom_call.1} parent=1 // pred_check
      _
    $region11: #{tpu_custom_call.1} parent=1 // pred_check_branch
      %15 = sbr.rel (0) target = $region13
    $region12: #{tpu_custom_call.1} parent=1 // pred_region
      _
    $region13: #{tpu_custom_call.1} parent=1 // pred_fallthru
      _
    // Predicated region
    $region14: #{tpu_custom_call.1} parent=1 // pred_check
      _
    $region15: #{tpu_custom_call.1} parent=1 // pred_check_branch
      %17 = sbr.rel (0) target = $region17
    $region16: #{tpu_custom_call.1} parent=1 // pred_region
      _
    $region17: #{tpu_custom_call.1} parent=1 // pred_fallthru
      _
    %v18 = vld [vmem:[%s0] sm:$0xff]
    %v19 = vmul.f32 %v18, %v18
    %20 = vadd.xlane.f32.xlu0 %v19
    %v21 = vpop.xlane.xlu0 %20
    %v22 = vmul.f32 %v21, 0.0625
    %v23 = vadd.f32 %v22, 1e-06
    %v24 = vrsqrt.pop %v23
    %v25 = vmul.f32 %v18, %v24
    %v26 = vld [vmem:[%s1] sm:$0xff]
    %28 = vset.pattern.permute.xlu0 0
    %29 = vperm.xlu0 %28, %v26
    %v30 = vpop.permute.xlu0 %29
    %v32 = vmul.f32 %v30, %v25
    %v33 = vld [vmem:[%s2] sm:$0xff]
    %35 = vset.pattern.permute.xlu0 0
    %36 = vperm.xlu0 %35, %v33
    %v37 = vpop.permute.xlu0 %36
    %v39 = vadd.f32 %v32, %v37
    %v40 = vld [vmem:[%s3] sm:$0xff]
    %42 = vset.pattern.permute.xlu0 0
    %43 = vperm.xlu0 %42, %v40
    %v44 = vpop.permute.xlu0 %43
    %v46 = vmax.f32 %v39, %v44
    %47 = vst [vmem:[#allocation2] sm:$0xff] %v46
    // Predicated region
    $region18: #{tpu_custom_call.1} parent=1 // pred_check
      _
    $region19: #{tpu_custom_call.1} parent=1 // pred_check_branch
      %49 = sbr.rel (0) target = $region21
    $region20: #{tpu_custom_call.1} parent=1 // pred_region
      %s51 = ssub.s32 128, 128
      %52 = vsyncadd [#allocation3], %s51
      %s54 = sshll.u32 [#allocation2], 4
      %s55 = int_to_ptr.vmem [resolvable:$true] %s54
      %57 = dma.vmem_to_hbm [thread:$0]  %s55, 128, %s4, [#allocation3]
    $region21: #{tpu_custom_call.1} parent=1 // pred_fallthru
      _
    // Predicated region
    $region22: #{tpu_custom_call.1} parent=1 // pred_check
      _
    $region23: #{tpu_custom_call.1} parent=1 // pred_check_branch
      %59 = sbr.rel (0) target = $region25
    $region24: #{tpu_custom_call.1} parent=1 // pred_region
      %60 = dma.done [#allocation3], 128
    $region25: #{tpu_custom_call.1} parent=1 // pred_fallthru
      _
    %61 = vsyncpa [#allocation3], 1

</llo_original>
